<compile_context>
chip_gen: v5e
topology: v5e:2x2
jax: 0.10.0
libtpu: 0.0.40
codegen_flags: <defaults>
</compile_context>

<pallas_src>
import functools

import jax
import jax.numpy as jnp
from jax import lax
from jax.experimental import pallas as pl
from jax.experimental.pallas import tpu as pltpu

_LANES = 128


def _sublanes_for(dtype) -> int:
    """Min sublane count so (S, 128) is a dense native tile for this dtype."""
    itemsize = jnp.dtype(dtype).itemsize
    return max(8, 32 // max(itemsize, 1))   # f32 -> 8, bf16/f16 -> 16, int8 -> 32


def _chip_defaults():
    """Return (groups_per_block_target, num_tensorcores) for the local chip."""
    kind = ""
    try:
        kind = jax.devices()[0].device_kind.lower()
    except Exception:  # pragma: no cover - CPU/interpret fallback
        pass
    if "v7" in kind:
        # 2 TCs/chip, ~2x HBM BW: 2 MiB blocks (512 groups x 4 KiB) + shard.
        return 512, 2
    if "v5 lite" in kind or "v5e" in kind or "v5lite" in kind:
        # Stay well inside v5e's 16 MiB scoped-VMEM default.
        return 256, 1
    # v6e and everything else: 2 MiB blocks, single TensorCore.
    return 512, 1


def _value_loss_kernel(v_ref, ov_ref, r_ref, o_ref, *, clip_eps, gpb, chunk):
    """Accumulate the block's loss sum into the (S,128) resident output tile."""
    s = pl.program_id(1)

    @pl.when(s == 0)
    def _init():
        o_ref[...] = jnp.zeros_like(o_ref)

    nchunks = gpb // chunk  # static

    def body(i, acc):
        g0 = pl.multiple_of(i * chunk, chunk)
        v = v_ref[pl.ds(g0, chunk), :, :].astype(jnp.float32)
        ov = ov_ref[pl.ds(g0, chunk), :, :].astype(jnp.float32)
        r = r_ref[pl.ds(g0, chunk), :, :].astype(jnp.float32)
        # values_clipped = old_values + clamp(values - old_values, -eps, eps)
        delta = jnp.clip(v - ov, -clip_eps, clip_eps)
        surr1 = (ov + delta - r) ** 2
        surr2 = (v - r) ** 2
        loss = jnp.maximum(surr1, surr2)
        # Fold the chunk down to one (S,128) tile: cross-vreg VALU adds only.
        return acc + jnp.sum(loss, axis=0)

    acc = lax.fori_loop(0, nchunks, body, jnp.zeros(o_ref.shape, jnp.float32))
    o_ref[...] += acc


def value_loss(values, old_values, reward, action_mask=None,
               clip_eps: float = 0.4, block_rows=None):
    """PPO clipped value loss; matches PyTorch ValueLoss.forward.

    values, old_values, reward: arrays of shape [B] (any shape is flattened).
    action_mask is accepted for API parity but unused (as in the reference).
    Returns a scalar float32 loss.
    """
    del action_mask  # unused in the reference forward pass

    v = jnp.ravel(values)
    ov = jnp.ravel(old_values)
    r = jnp.ravel(reward)
    n = int(v.size)

    dtype = jnp.result_type(v.dtype, ov.dtype, r.dtype)
    if jnp.dtype(dtype).itemsize > 4 or not (
            jnp.issubdtype(dtype, jnp.floating) or jnp.issubdtype(dtype, jnp.integer)):
        dtype = jnp.float32
    v, ov, r = v.astype(dtype), ov.astype(dtype), r.astype(dtype)

    sub = _sublanes_for(dtype)
    unit = sub * _LANES                       # elements per (sub,128) vreg group
    gpb_target, num_tc = _chip_defaults()
    if block_rows is not None:
        gpb_target = max(1, int(block_rows) // sub)

    bulk_groups = n // unit
    if bulk_groups == 0:
        # Tiny input: pad up to a single group (zeros contribute exactly 0).
        pad = unit - n
        v, ov, r = (jnp.pad(x, (0, pad)) for x in (v, ov, r))
        bulk_groups = 1

    gpb = min(gpb_target, bulk_groups)
    chunk = max(1, 64 // sub)                 # ~64 f32-rows of work per inner step
    if gpb >= chunk:
        gpb -= gpb % chunk                    # keep chunk | gpb
    else:
        chunk = gpb

    total_blocks = bulk_groups // gpb
    num_par = num_tc if (num_tc > 1 and total_blocks >= num_tc) else 1
    steps = total_blocks // num_par
    kernel_groups = num_par * steps * gpb
    kernel_elems = kernel_groups * unit
    tail_elems = int(v.size) - kernel_elems   # < num_par blocks + 1 group

    def slab(x):
        xk = x[:kernel_elems] if kernel_elems != int(x.size) else x
        return xk.reshape(kernel_groups, sub, _LANES)

    kernel = functools.partial(_value_loss_kernel, clip_eps=float(clip_eps),
                               gpb=gpb, chunk=chunk)
    in_spec = pl.BlockSpec((gpb, sub, _LANES),
                           lambda p, s: (p * steps + s, 0, 0))
    block_bytes = gpb * unit * jnp.dtype(dtype).itemsize
    vmem_limit = int(min(64 << 20, max(16 << 20, 8 * block_bytes + (4 << 20))))

    partials = pl.pallas_call(
        kernel,
        out_shape=jax.ShapeDtypeStruct((num_par * sub, _LANES), jnp.float32),
        grid_spec=pltpu.PrefetchScalarGridSpec(
            num_scalar_prefetch=0,
            grid=(num_par, steps),
            in_specs=[in_spec, in_spec, in_spec],
            out_specs=pl.BlockSpec((sub, _LANES), lambda p, s: (p, 0)),
        ),
        compiler_params=pltpu.CompilerParams(
            dimension_semantics=("parallel", "arbitrary"),
            vmem_limit_bytes=vmem_limit),
    )(slab(v), slab(ov), slab(r))

    total = jnp.sum(partials, dtype=jnp.float32)

    if tail_elems > 0:
        # Sub-slab remainder: one fused XLA pass over < num_par blocks of data.
        vt = v[kernel_elems:].astype(jnp.float32)
        ovt = ov[kernel_elems:].astype(jnp.float32)
        rt = r[kernel_elems:].astype(jnp.float32)
        dt = jnp.clip(vt - ovt, -clip_eps, clip_eps)
        total = total + jnp.sum(
            jnp.maximum((ovt + dt - rt) ** 2, (vt - rt) ** 2), dtype=jnp.float32)

    return total * jnp.float32(1.0 / n)


if __name__ == "__main__":
    key = jax.random.PRNGKey(0)
    k1, k2, k3 = jax.random.split(key, 3)

    def ref_loss(v, ov, r, eps=0.4):
        v = v.astype(jnp.float32)
        ov = ov.astype(jnp.float32)
        r = r.astype(jnp.float32)
        vc = ov + jnp.clip(v - ov, -eps, eps)
        return jnp.mean(jnp.maximum((vc - r) ** 2, (v - r) ** 2))

    def check(B, dtype=jnp.float32, **kw):
        v = jax.random.normal(k1, (B,), jnp.float32).astype(dtype)
        ov = jax.random.normal(k2, (B,), jnp.float32).astype(dtype)
        r = jax.random.normal(k3, (B,), jnp.float32).astype(dtype)
        out = jax.block_until_ready(value_loss(v, ov, r, clip_eps=0.4, **kw))
        ref = ref_loss(v, ov, r)
        assert jnp.allclose(out, ref, atol=2e-4, rtol=2e-4), (B, dtype, out, ref)

    check(8)                               # [B]=8 (module-scale): single padded group
    check(4096)                            # slab-aligned, single-block path (no pad)
    check(5000)                            # kernel bulk + sub-group jnp tail
    check(3 * 4096 + 17, block_rows=16)    # multi-block grid (+ parallel shard on v7x)
    check(1_200_000)                       # multiple default-size blocks + jnp tail
    check(4096, dtype=jnp.bfloat16)        # dtype-aware (16,128) sublane grouping

    print("KERNEL_OK")
</pallas_src>

<mosaic_0001>
module attributes {stable_mosaic.version = 11 : i64} {
  func.func @_value_loss_kernel(%arg0: i32, %arg1: i32, %arg2: memref<1x8x128xf32, #tpu.memory_space<vmem>>, %arg3: memref<1x8x128xf32, #tpu.memory_space<vmem>>, %arg4: memref<1x8x128xf32, #tpu.memory_space<vmem>>, %arg5: memref<8x128xf32, #tpu.memory_space<vmem>>) attributes {dimension_semantics = [#tpu.dimension_semantics<parallel>, #tpu.dimension_semantics<arbitrary>], iteration_bounds = array<i64: 1, 1>, scalar_prefetch = 0 : i64, scratch_operands = 0 : i64, tpu.core_type = #tpu.core_type<tc>, window_params = [{transform_indices = @transform_0, window_bounds = array<i64: 1, 8, 128>}, {transform_indices = @transform_1, window_bounds = array<i64: 1, 8, 128>}, {transform_indices = @transform_2, window_bounds = array<i64: 1, 8, 128>}, {transform_indices = @transform_3, window_bounds = array<i64: 8, 128>}]} {
    %c0_i32 = arith.constant 0 : i32
    %0 = arith.cmpi eq, %arg1, %c0_i32 : i32
    %1 = arith.extui %0 : i1 to i32
    %c0_i32_0 = arith.constant 0 : i32
    %2 = arith.cmpi ne, %1, %c0_i32_0 : i32
    scf.if %2 {
      %cst_15 = arith.constant 0.000000e+00 : f32
      %28 = vector.broadcast %cst_15 : f32 to vector<8x128xf32>
      %c0_16 = arith.constant 0 : index
      %c0_17 = arith.constant 0 : index
      %29 = vector.load %arg5[%c0_16, %c0_17] : memref<8x128xf32, #tpu.memory_space<vmem>>, vector<8x128xf32>
      tpu.vector_store %arg5[%c0_16, %c0_17], %28 {strides = array<i32>} : memref<8x128xf32, #tpu.memory_space<vmem>>, vector<8x128xf32>,
    } else {
    }
    %cst = arith.constant 0.000000e+00 : f32
    %3 = vector.broadcast %cst : f32 to vector<8x128xf32>
    %c0_i32_1 = arith.constant 0 : i32
    %c1_i32 = arith.constant 1 : i32
    %4 = arith.muli %c0_i32_1, %c1_i32 : i32
    %5 = tpu.assume_multiple %4, 1 : i32
    %6 = arith.index_cast %5 : i32 to index
    %c0 = arith.constant 0 : index
    %c0_2 = arith.constant 0 : index
    %7 = vector.load %arg2[%6, %c0, %c0_2] : memref<1x8x128xf32, #tpu.memory_space<vmem>>, vector<1x8x128xf32>
    %8 = arith.index_cast %5 : i32 to index
    %c0_3 = arith.constant 0 : index
    %c0_4 = arith.constant 0 : index
    %9 = vector.load %arg3[%8, %c0_3, %c0_4] : memref<1x8x128xf32, #tpu.memory_space<vmem>>, vector<1x8x128xf32>
    %10 = arith.index_cast %5 : i32 to index
    %c0_5 = arith.constant 0 : index
    %c0_6 = arith.constant 0 : index
    %11 = vector.load %arg4[%10, %c0_5, %c0_6] : memref<1x8x128xf32, #tpu.memory_space<vmem>>, vector<1x8x128xf32>
    %12 = arith.subf %7, %9 : vector<1x8x128xf32>
    %cst_7 = arith.constant -4.000000e-01 : f32
    %cst_8 = arith.constant 4.000000e-01 : f32
    %13 = vector.broadcast %cst_7 : f32 to vector<1x8x128xf32>
    %14 = arith.maximumf %13, %12 : vector<1x8x128xf32>
    %15 = vector.broadcast %cst_8 : f32 to vector<1x8x128xf32>
    %16 = arith.minimumf %15, %14 : vector<1x8x128xf32>
    %17 = arith.addf %9, %16 : vector<1x8x128xf32>
    %18 = arith.subf %17, %11 : vector<1x8x128xf32>
    %19 = arith.mulf %18, %18 : vector<1x8x128xf32>
    %20 = arith.subf %7, %11 : vector<1x8x128xf32>
    %21 = arith.mulf %20, %20 : vector<1x8x128xf32>
    %22 = arith.maximumf %19, %21 : vector<1x8x128xf32>
    %cst_9 = arith.constant dense<0.000000e+00> : vector<8x128xf32>
    %23 = vector.multi_reduction <add>, %22, %cst_9 [0] : vector<1x8x128xf32> to vector<8x128xf32>
    %24 = arith.addf %3, %23 : vector<8x128xf32>
    %c1_i32_10 = arith.constant 1 : i32
    %c0_11 = arith.constant 0 : index
    %c0_12 = arith.constant 0 : index
    %25 = vector.load %arg5[%c0_11, %c0_12] : memref<8x128xf32, #tpu.memory_space<vmem>>, vector<8x128xf32>
    %26 = arith.addf %25, %24 : vector<8x128xf32>
    %c0_13 = arith.constant 0 : index
    %c0_14 = arith.constant 0 : index
    %27 = vector.load %arg5[%c0_13, %c0_14] : memref<8x128xf32, #tpu.memory_space<vmem>>, vector<8x128xf32>
    tpu.vector_store %arg5[%c0_13, %c0_14], %26 {strides = array<i32>} : memref<8x128xf32, #tpu.memory_space<vmem>>, vector<8x128xf32>,
    return
  }
  func.func @transform_0(%arg0: i32, %arg1: i32) -> (i32, i32, i32) {
    %c1_i32 = arith.constant 1 : i32
    %0 = arith.muli %arg0, %c1_i32 : i32
    %1 = arith.addi %0, %arg1 : i32
    %c0_i32 = arith.constant 0 : i32
    %c0_i32_0 = arith.constant 0 : i32
    %c0_i32_1 = arith.constant 0 : i32
    return %1, %c0_i32, %c0_i32_0 : i32, i32, i32
  }
  func.func @transform_1(%arg0: i32, %arg1: i32) -> (i32, i32, i32) {
    %c1_i32 = arith.constant 1 : i32
    %0 = arith.muli %arg0, %c1_i32 : i32
    %1 = arith.addi %0, %arg1 : i32
    %c0_i32 = arith.constant 0 : i32
    %c0_i32_0 = arith.constant 0 : i32
    %c0_i32_1 = arith.constant 0 : i32
    return %1, %c0_i32, %c0_i32_0 : i32, i32, i32
  }
  func.func @transform_2(%arg0: i32, %arg1: i32) -> (i32, i32, i32) {
    %c1_i32 = arith.constant 1 : i32
    %0 = arith.muli %arg0, %c1_i32 : i32
    %1 = arith.addi %0, %arg1 : i32
    %c0_i32 = arith.constant 0 : i32
    %c0_i32_0 = arith.constant 0 : i32
    %c0_i32_1 = arith.constant 0 : i32
    return %1, %c0_i32, %c0_i32_0 : i32, i32, i32
  }
  func.func @transform_3(%arg0: i32, %arg1: i32) -> (i32, i32) {
    %c0_i32 = arith.constant 0 : i32
    %c0_i32_0 = arith.constant 0 : i32
    return %arg0, %c0_i32 : i32, i32
  }
}

</mosaic_0001>

<llo_original>
// kernel: tpu_custom_call.1
$region0: #{tpu_custom_call.1}
  #allocation0 [shape = 'u32[]', space=smem, size = 0x4, offset = 0x4, fixed_abs, tag = 'smem constant byte address 0x4 - core index']
  #allocation1 [shape = 'u32[72,128]{1,0:T(1,128)}', space=vmem, size = 0x9000, scoped, tag = 'internal scratch']
  %s0 = inlined_call_operand.hbm [shape: f32[1,8,128], index: 0, kind: input, shape index: {}]
  %s1 = inlined_call_operand.hbm [shape: f32[1,8,128], index: 1, kind: input, shape index: {}]
  %s2 = inlined_call_operand.hbm [shape: f32[1,8,128], index: 2, kind: input, shape index: {}]
  %s3 = inlined_call_operand.hbm [shape: f32[8,128], index: 3, kind: output, shape index: {}]
  %s4 = sld [smem:[#allocation0]]
  $region38: #{tpu_custom_call.1} parent=0
    _
  %s6 = ssub.s32 1, %s4
  %s7 = scalar_select 0, %s6, %s4
  $region1: #{tpu_custom_call.1} parent=0
    #allocation2 [shape = 'u8[4096]{0}', space=vmem, size = 0x1000, scoped, tag = 'input window, operand 0, single buffered']
    #allocation3 [shape = 's32[1]{0}', space=sflag, size = 0x4, scoped, tag = 'scoped memory for tpu_custom_call.1']
    #allocation4 [shape = 's32[1]{0}', space=sflag, size = 0x4, scoped, tag = 'scoped memory for tpu_custom_call.1']
    #allocation5 [shape = 'u8[4096]{0}', space=vmem, size = 0x1000, scoped, tag = 'input window, operand 1, single buffered']
    #allocation6 [shape = 's32[1]{0}', space=sflag, size = 0x4, scoped, tag = 'scoped memory for tpu_custom_call.1']
    #allocation7 [shape = 'u8[4096]{0}', space=vmem, size = 0x1000, scoped, tag = 'input window, operand 2, single buffered']
    #allocation8 [shape = 'u8[4096]{0}', space=vmem, size = 0x1000, scoped, tag = 'output window, operand 0, single buffered']
    %8 = vsyncpa [#allocation3], 0
    %9 = vsyncpa [#allocation6], 0
    %10 = vsyncpa [#allocation4], 0
    // Predicated region
    $region2: #{tpu_custom_call.1} parent=1 // pred_check
      _
    $region3: #{tpu_custom_call.1} parent=1 // pred_check_branch
      %12 = sbr.rel (0) target = $region5
    $region4: #{tpu_custom_call.1} parent=1 // pred_region
      %s13 = sadd.s32 0, 0
      %15 = vsyncadd [#allocation3], 0
      %s16 = smul.addr %s13, 8
      %s17 = scalar_lea.hbm %s0, %s16
      %s19 = sshll.u32 %s17, 4
      %s20 = int_to_ptr.hbm [resolvable:$true] %s19
      %s21 = sshll.u32 [#allocation2], 4
      %s22 = int_to_ptr.vmem [resolvable:$true] %s21
      %24 = dma.hbm_to_vmem [thread:$0]  %s20, 128, %s22, [#allocation3]
    $region5: #{tpu_custom_call.1} parent=1 // pred_fallthru
      _
    // Predicated region
    $region6: #{tpu_custom_call.1} parent=1 // pred_check
      _
    $region7: #{tpu_custom_call.1} parent=1 // pred_check_branch
      %26 = sbr.rel (0) target = $region9
    $region8: #{tpu_custom_call.1} parent=1 // pred_region
      %s27 = sadd.s32 0, 0
      %29 = vsyncadd [#allocation6], 0
      %s30 = smul.addr %s27, 8
      %s31 = scalar_lea.hbm %s1, %s30
      %s33 = sshll.u32 %s31, 4
      %s34 = int_to_ptr.hbm [resolvable:$true] %s33
      %s35 = sshll.u32 [#allocation5], 4
      %s36 = int_to_ptr.vmem [resolvable:$true] %s35
      %38 = dma.hbm_to_vmem [thread:$0]  %s34, 128, %s36, [#allocation6]
    $region9: #{tpu_custom_call.1} parent=1 // pred_fallthru
      _
    // Predicated region
    $region10: #{tpu_custom_call.1} parent=1 // pred_check
      _
    $region11: #{tpu_custom_call.1} parent=1 // pred_check_branch
      %40 = sbr.rel (0) target = $region13
    $region12: #{tpu_custom_call.1} parent=1 // pred_region
      %s41 = sadd.s32 0, 0
      %43 = vsyncadd [#allocation6], 0
      %s44 = smul.addr %s41, 8
      %s45 = scalar_lea.hbm %s2, %s44
      %s47 = sshll.u32 %s45, 4
      %s48 = int_to_ptr.hbm [resolvable:$true] %s47
      %s49 = sshll.u32 [#allocation7], 4
      %s50 = int_to_ptr.vmem [resolvable:$true] %s49
      %52 = dma.hbm_to_vmem [thread:$0]  %s48, 128, %s50, [#allocation6]
    $region13: #{tpu_custom_call.1} parent=1 // pred_fallthru
      _
    // Predicated region
    $region14: #{tpu_custom_call.1} parent=1 // pred_check
      _
    $region15: #{tpu_custom_call.1} parent=1 // pred_check_branch
      %54 = sbr.rel (0) target = $region17
    $region16: #{tpu_custom_call.1} parent=1 // pred_region
      %56 = dma.done [#allocation3], 128
    $region17: #{tpu_custom_call.1} parent=1 // pred_fallthru
      _
    // Predicated region
    $region18: #{tpu_custom_call.1} parent=1 // pred_check
      _
    $region19: #{tpu_custom_call.1} parent=1 // pred_check_branch
      %58 = sbr.rel (0) target = $region21
    $region20: #{tpu_custom_call.1} parent=1 // pred_region
      %60 = dma.done [#allocation6], 128
    $region21: #{tpu_custom_call.1} parent=1 // pred_fallthru
      _
    // Predicated region
    $region22: #{tpu_custom_call.1} parent=1 // pred_check
      _
    $region23: #{tpu_custom_call.1} parent=1 // pred_check_branch
      %62 = sbr.rel (0) target = $region25
    $region24: #{tpu_custom_call.1} parent=1 // pred_region
      %64 = dma.done [#allocation6], 128
    $region25: #{tpu_custom_call.1} parent=1 // pred_fallthru
      _
    %s65 = sadd.s32 0, 0
    %s66 = sadd.s32 0, 0
    %s67 = sadd.s32 0, 0
    %p68 = scmp.eq.s32.totalorder 0, 0
    // Predicated region
    $region26: #{tpu_custom_call.1} parent=1 // pred_check
      %p69 = pneg %p68
    $region27: #{tpu_custom_call.1} parent=1 // pred_check_branch
      %71 = sbr.rel (%p69) target = $region29
    $region28: #{tpu_custom_call.1} parent=1 // pred_region
      %72 = vst [vmem:[#allocation8] sm:$0xff] 0.0
    $region29: #{tpu_custom_call.1} parent=1 // pred_fallthru
      _
    %s73 = smul.u32 0, 8
    %s74 = scalar_lea.vmem [#allocation2], %s73
    %v75 = vld [vmem:[%s74] sm:$0xff]
    %s76 = scalar_lea.vmem [#allocation5], %s73
    %v77 = vld [vmem:[%s76] sm:$0xff]
    %s78 = scalar_lea.vmem [#allocation7], %s73
    %v79 = vld [vmem:[%s78] sm:$0xff]
    %v80 = vsub.f32 %v75, %v77
    %v81 = vmax.f32 %v80, -0.4
    %v82 = vmin.f32 %v81, 0.4
    %v83 = vadd.f32 %v77, %v82
    %v84 = vsub.f32 %v83, %v79
    %v85 = vmul.f32 %v84, %v84
    %v86 = vsub.f32 %v75, %v79
    %v87 = vmul.f32 %v86, %v86
    %v88 = vmax.f32 %v85, %v87
    %v89 = vadd.f32 %v88, 0.0
    %v90 = vadd.f32 %v89, 0.0
    %v91 = vld [vmem:[#allocation8] sm:$0xff]
    %v92 = vadd.f32 %v91, %v90
    %93 = vst [vmem:[#allocation8] sm:$0xff] %v92
    // Predicated region
    $region30: #{tpu_custom_call.1} parent=1 // pred_check
      _
    $region31: #{tpu_custom_call.1} parent=1 // pred_check_branch
      %95 = sbr.rel (0) target = $region33
    $region32: #{tpu_custom_call.1} parent=1 // pred_region
      %97 = vsyncadd [#allocation4], 0
      %s99 = sshll.u32 [#allocation8], 4
      %s100 = int_to_ptr.vmem [resolvable:$true] %s99
      %s101 = sshll.u32 %s3, 4
      %s102 = int_to_ptr.hbm [resolvable:$true] %s101
      %104 = dma.vmem_to_hbm [thread:$0]  %s100, 128, %s102, [#allocation4]
    $region33: #{tpu_custom_call.1} parent=1 // pred_fallthru
      _
    // Predicated region
    $region34: #{tpu_custom_call.1} parent=1 // pred_check
      _
    $region35: #{tpu_custom_call.1} parent=1 // pred_check_branch
      %106 = sbr.rel (0) target = $region37
    $region36: #{tpu_custom_call.1} parent=1 // pred_region
      %108 = dma.done [#allocation4], 128
    $region37: #{tpu_custom_call.1} parent=1 // pred_fallthru
      _
    %109 = vsyncpa [#allocation3], 1
    %110 = vsyncpa [#allocation6], 1
    %111 = vsyncpa [#allocation4], 1

</llo_original>
